<compile_context>
chip_gen: v7x
topology: tpu7x:2x2x1
jax: 0.10.0
libtpu: 0.0.40
codegen_flags: <defaults>
</compile_context>

<pallas_src>
import functools

import jax
import jax.numpy as jnp
from jax.experimental import pallas as pl
from jax.experimental.pallas import tpu as pltpu

HIDDEN = 256
OUT_PAD = 128  # fused head output width (lane-dense); holds action_dim logits + 1 value


def _round_up(x, m):
    return (x + m - 1) // m * m


def _ac_kernel(obs_ref,
               w1_ref, b1_ref, w2_ref, b2_ref,   # shared layers
               wh_ref, bh_ref,                   # fused policy|value hidden layer [256, 512]
               wo_ref, bo_ref,                   # fused output layer [512, 128] (block-diag, 0-padded)
               out_ref):
    f32 = jnp.float32
    bf16 = jnp.bfloat16

    x = obs_ref[...]  # bf16 [TB, obs_dim]

    # shared_layers: Linear -> ReLU -> Linear -> ReLU  (bf16 MXU, f32 accumulate)
    z = jnp.dot(x, w1_ref[...], preferred_element_type=f32) + b1_ref[...]
    z = jnp.maximum(z, 0.0).astype(bf16)
    z = jnp.dot(z, w2_ref[...], preferred_element_type=f32) + b2_ref[...]
    z = jnp.maximum(z, 0.0).astype(bf16)

    # fused heads, hidden layer: [TB, 256] @ [256, 512] -> [p | v]
    h = jnp.dot(z, wh_ref[...], preferred_element_type=f32) + bh_ref[...]
    h = jnp.maximum(h, 0.0).astype(bf16)

    # fused output layer: [TB, 512] @ [512, 128] -> lane-dense slab
    # cols [0:action_dim] = policy logits, col [action_dim] = value, rest = 0.
    out = jnp.dot(h, wo_ref[...], preferred_element_type=f32) + bo_ref[...]
    out_ref[...] = out.astype(out_ref.dtype)


@functools.partial(jax.jit, static_argnames=("action_dim", "tile_b"))
def actor_critic_forward(obs, params, *, action_dim, tile_b=256):
    """obs: [B, obs_dim] f32.  params: fused kernel params (see make_kernel_params)."""
    B, obs_dim = obs.shape
    tb = min(tile_b, _round_up(B, 8))        # keep well under v7x's 64 MiB VMEM
    Bp = _round_up(B, tb)

    obs_p = jnp.pad(obs, ((0, Bp - B), (0, 0))).astype(jnp.bfloat16)

    grid = (Bp // tb,)

    def full_block(arr):
        return pl.BlockSpec(arr.shape, lambda i: (0,) * arr.ndim)  # resident across grid

    in_specs = [
        pl.BlockSpec((tb, obs_dim), lambda i: (i, 0)),
        full_block(params["w1"]), full_block(params["b1"]),
        full_block(params["w2"]), full_block(params["b2"]),
        full_block(params["wh"]), full_block(params["bh"]),
        full_block(params["wo"]), full_block(params["bo"]),
    ]
    out_specs = pl.BlockSpec((tb, OUT_PAD), lambda i: (i, 0))
    out_shape = jax.ShapeDtypeStruct((Bp, OUT_PAD), jnp.float32)

    flops = 2 * Bp * (obs_dim * HIDDEN + HIDDEN * HIDDEN
                      + HIDDEN * 2 * HIDDEN + 2 * HIDDEN * OUT_PAD)
    weight_bytes = sum(int(v.size) * v.dtype.itemsize for v in params.values())
    cost = pl.CostEstimate(
        flops=flops,
        transcendentals=0,
        bytes_accessed=int(obs_p.size) * 2 + weight_bytes + Bp * OUT_PAD * 4,
    )

    slab = pl.pallas_call(
        _ac_kernel,
        out_shape=out_shape,
        grid=grid,
        in_specs=in_specs,
        out_specs=out_specs,
        compiler_params=pltpu.CompilerParams(dimension_semantics=("parallel",)),
        cost_estimate=cost,
    )(
        obs_p,
        params["w1"], params["b1"], params["w2"], params["b2"],
        params["wh"], params["bh"], params["wo"], params["bo"],
    )

    logits = slab[:B, :action_dim]
    value = slab[:B, action_dim:action_dim + 1]
    return logits, value


def _linear_init(key, fan_in, fan_out):
    # Mimic PyTorch nn.Linear default init: U(-1/sqrt(fan_in), 1/sqrt(fan_in)).
    kw, kb = jax.random.split(key)
    bound = 1.0 / jnp.sqrt(jnp.float32(fan_in))
    w = jax.random.uniform(kw, (fan_in, fan_out), jnp.float32, -bound, bound)
    b = jax.random.uniform(kb, (1, fan_out), jnp.float32, -bound, bound)
    # bf16 weights (MXU-native on v5e/v6e/v7x, halves weight DMA); f32 biases.
    return w.astype(jnp.bfloat16), b


def init_params(key, obs_dim, action_dim):
    """Raw (unfused) params mirroring the PyTorch module's layer structure."""
    keys = jax.random.split(key, 6)
    w1, b1 = _linear_init(keys[0], obs_dim, HIDDEN)
    w2, b2 = _linear_init(keys[1], HIDDEN, HIDDEN)
    wp1, bp1 = _linear_init(keys[2], HIDDEN, HIDDEN)
    wp2, bp2 = _linear_init(keys[3], HIDDEN, action_dim)
    wv1, bv1 = _linear_init(keys[4], HIDDEN, HIDDEN)
    wv2, bv2 = _linear_init(keys[5], HIDDEN, 1)
    return dict(w1=w1, b1=b1, w2=w2, b2=b2,
                wp1=wp1, bp1=bp1, wp2=wp2, bp2=bp2,
                wv1=wv1, bv1=bv1, wv2=wv2, bv2=bv2)


def make_kernel_params(raw, action_dim):
    """Fuse policy/value head weights for the kernel (exact zero padding, no re-rounding)."""
    assert action_dim + 1 <= OUT_PAD, "fused output slab too narrow for action_dim"
    # Hidden head layer: [256, 512] = [wp1 | wv1]
    wh = jnp.concatenate([raw["wp1"], raw["wv1"]], axis=1)
    bh = jnp.concatenate([raw["bp1"], raw["bv1"]], axis=1)
    # Output layer: block-diagonal [512, 128]:
    #   rows 0:256  -> wp2 in cols [0:action_dim]
    #   rows 256:512-> wv2 in col  [action_dim]
    top = jnp.pad(raw["wp2"], ((0, 0), (0, OUT_PAD - action_dim)))
    bot = jnp.pad(raw["wv2"], ((0, 0), (action_dim, OUT_PAD - action_dim - 1)))
    wo = jnp.concatenate([top, bot], axis=0)
    bo = jnp.pad(jnp.concatenate([raw["bp2"], raw["bv2"]], axis=1),
                 ((0, 0), (0, OUT_PAD - action_dim - 1)))
    return dict(w1=raw["w1"], b1=raw["b1"], w2=raw["w2"], b2=raw["b2"],
                wh=wh, bh=bh, wo=wo, bo=bo)


def reference_forward(obs, raw):
    """Pure-JAX reference mirroring the kernel math (bf16 weights/acts, f32 accumulate)."""
    f32, bf16 = jnp.float32, jnp.bfloat16
    relu = lambda a: jnp.maximum(a, 0.0)
    x = obs.astype(bf16)
    z = relu(jnp.dot(x, raw["w1"], preferred_element_type=f32) + raw["b1"]).astype(bf16)
    z = relu(jnp.dot(z, raw["w2"], preferred_element_type=f32) + raw["b2"]).astype(bf16)
    p = relu(jnp.dot(z, raw["wp1"], preferred_element_type=f32) + raw["bp1"]).astype(bf16)
    logits = jnp.dot(p, raw["wp2"], preferred_element_type=f32) + raw["bp2"]
    v = relu(jnp.dot(z, raw["wv1"], preferred_element_type=f32) + raw["bv1"]).astype(bf16)
    value = jnp.dot(v, raw["wv2"], preferred_element_type=f32) + raw["bv2"]
    return logits, value


if __name__ == "__main__":
    key = jax.random.PRNGKey(0)
    k_obs, k_params = jax.random.split(key)

    B, OBS_DIM, ACTION_DIM = 8, 32, 8
    obs = jax.random.normal(k_obs, (B, OBS_DIM), jnp.float32)

    raw_params = init_params(k_params, OBS_DIM, ACTION_DIM)
    kernel_params = make_kernel_params(raw_params, ACTION_DIM)

    logits, value = actor_critic_forward(obs, kernel_params, action_dim=ACTION_DIM)
    jax.block_until_ready((logits, value))

    ref_logits, ref_value = reference_forward(obs, raw_params)
    assert logits.shape == (B, ACTION_DIM) and value.shape == (B, 1)
    assert jnp.allclose(logits, ref_logits, atol=5e-3, rtol=5e-3)
    assert jnp.allclose(value, ref_value, atol=5e-3, rtol=5e-3)

    print("KERNEL_OK")
</pallas_src>

<mosaic_0001>
module attributes {stable_mosaic.version = 11 : i64} {
  func.func @_ac_kernel(%arg0: i32, %arg1: memref<8x32xbf16, #tpu.memory_space<vmem>>, %arg2: memref<32x256xbf16, #tpu.memory_space<vmem>>, %arg3: memref<1x256xf32, #tpu.memory_space<vmem>>, %arg4: memref<256x256xbf16, #tpu.memory_space<vmem>>, %arg5: memref<1x256xf32, #tpu.memory_space<vmem>>, %arg6: memref<256x512xbf16, #tpu.memory_space<vmem>>, %arg7: memref<1x512xf32, #tpu.memory_space<vmem>>, %arg8: memref<512x128xbf16, #tpu.memory_space<vmem>>, %arg9: memref<1x128xf32, #tpu.memory_space<vmem>>, %arg10: memref<8x128xf32, #tpu.memory_space<vmem>>) attributes {dimension_semantics = [#tpu.dimension_semantics<parallel>], iteration_bounds = array<i64: 1>, scalar_prefetch = 0 : i64, scratch_operands = 0 : i64, tpu.core_type = #tpu.core_type<tc>, window_params = [{transform_indices = @transform_0, window_bounds = array<i64: 8, 32>}, {pipeline_mode = #tpu.pipeline_mode<synchronous>, transform_indices = @transform_1, window_bounds = array<i64: 32, 256>}, {pipeline_mode = #tpu.pipeline_mode<synchronous>, transform_indices = @transform_2, window_bounds = array<i64: 1, 256>}, {pipeline_mode = #tpu.pipeline_mode<synchronous>, transform_indices = @transform_3, window_bounds = array<i64: 256, 256>}, {pipeline_mode = #tpu.pipeline_mode<synchronous>, transform_indices = @transform_4, window_bounds = array<i64: 1, 256>}, {pipeline_mode = #tpu.pipeline_mode<synchronous>, transform_indices = @transform_5, window_bounds = array<i64: 256, 512>}, {pipeline_mode = #tpu.pipeline_mode<synchronous>, transform_indices = @transform_6, window_bounds = array<i64: 1, 512>}, {pipeline_mode = #tpu.pipeline_mode<synchronous>, transform_indices = @transform_7, window_bounds = array<i64: 512, 128>}, {pipeline_mode = #tpu.pipeline_mode<synchronous>, transform_indices = @transform_8, window_bounds = array<i64: 1, 128>}, {transform_indices = @transform_9, window_bounds = array<i64: 8, 128>}]} {
    %c0 = arith.constant 0 : index
    %c0_0 = arith.constant 0 : index
    %0 = vector.load %arg1[%c0, %c0_0] : memref<8x32xbf16, #tpu.memory_space<vmem>>, vector<8x32xbf16>
    %c0_1 = arith.constant 0 : index
    %c0_2 = arith.constant 0 : index
    %1 = vector.load %arg2[%c0_1, %c0_2] : memref<32x256xbf16, #tpu.memory_space<vmem>>, vector<32x256xbf16>
    %cst = arith.constant dense<0.000000e+00> : vector<8x256xf32>
    %2 = tpu.matmul %0, %1, %cst {dimension_numbers = #tpu.dot_dimension_numbers<[1], [0], [0], [1], [0, 0, 1, 1], [], []>} : vector<8x32xbf16>, vector<32x256xbf16>, vector<8x256xf32> -> vector<8x256xf32>
    %c0_3 = arith.constant 0 : index
    %c0_4 = arith.constant 0 : index
    %3 = vector.load %arg3[%c0_3, %c0_4] : memref<1x256xf32, #tpu.memory_space<vmem>>, vector<1x256xf32>
    %4 = vector.broadcast %3 : vector<1x256xf32> to vector<8x256xf32>
    %5 = arith.addf %2, %4 : vector<8x256xf32>
    %cst_5 = arith.constant 0.000000e+00 : f32
    %6 = vector.broadcast %cst_5 : f32 to vector<8x256xf32>
    %7 = arith.maximumf %5, %6 : vector<8x256xf32>
    %8 = arith.truncf %7 : vector<8x256xf32> to vector<8x256xbf16>
    %c0_6 = arith.constant 0 : index
    %c0_7 = arith.constant 0 : index
    %9 = vector.load %arg4[%c0_6, %c0_7] : memref<256x256xbf16, #tpu.memory_space<vmem>>, vector<256x256xbf16>
    %cst_8 = arith.constant dense<0.000000e+00> : vector<8x256xf32>
    %10 = tpu.matmul %8, %9, %cst_8 {dimension_numbers = #tpu.dot_dimension_numbers<[1], [0], [0], [1], [0, 0, 1, 1], [], []>} : vector<8x256xbf16>, vector<256x256xbf16>, vector<8x256xf32> -> vector<8x256xf32>
    %c0_9 = arith.constant 0 : index
    %c0_10 = arith.constant 0 : index
    %11 = vector.load %arg5[%c0_9, %c0_10] : memref<1x256xf32, #tpu.memory_space<vmem>>, vector<1x256xf32>
    %12 = vector.broadcast %11 : vector<1x256xf32> to vector<8x256xf32>
    %13 = arith.addf %10, %12 : vector<8x256xf32>
    %cst_11 = arith.constant 0.000000e+00 : f32
    %14 = vector.broadcast %cst_11 : f32 to vector<8x256xf32>
    %15 = arith.maximumf %13, %14 : vector<8x256xf32>
    %16 = arith.truncf %15 : vector<8x256xf32> to vector<8x256xbf16>
    %c0_12 = arith.constant 0 : index
    %c0_13 = arith.constant 0 : index
    %17 = vector.load %arg6[%c0_12, %c0_13] : memref<256x512xbf16, #tpu.memory_space<vmem>>, vector<256x512xbf16>
    %cst_14 = arith.constant dense<0.000000e+00> : vector<8x512xf32>
    %18 = tpu.matmul %16, %17, %cst_14 {dimension_numbers = #tpu.dot_dimension_numbers<[1], [0], [0], [1], [0, 0, 1, 1], [], []>} : vector<8x256xbf16>, vector<256x512xbf16>, vector<8x512xf32> -> vector<8x512xf32>
    %c0_15 = arith.constant 0 : index
    %c0_16 = arith.constant 0 : index
    %19 = vector.load %arg7[%c0_15, %c0_16] : memref<1x512xf32, #tpu.memory_space<vmem>>, vector<1x512xf32>
    %20 = vector.broadcast %19 : vector<1x512xf32> to vector<8x512xf32>
    %21 = arith.addf %18, %20 : vector<8x512xf32>
    %cst_17 = arith.constant 0.000000e+00 : f32
    %22 = vector.broadcast %cst_17 : f32 to vector<8x512xf32>
    %23 = arith.maximumf %21, %22 : vector<8x512xf32>
    %24 = arith.truncf %23 : vector<8x512xf32> to vector<8x512xbf16>
    %c0_18 = arith.constant 0 : index
    %c0_19 = arith.constant 0 : index
    %25 = vector.load %arg8[%c0_18, %c0_19] : memref<512x128xbf16, #tpu.memory_space<vmem>>, vector<512x128xbf16>
    %cst_20 = arith.constant dense<0.000000e+00> : vector<8x128xf32>
    %26 = tpu.matmul %24, %25, %cst_20 {dimension_numbers = #tpu.dot_dimension_numbers<[1], [0], [0], [1], [0, 0, 1, 1], [], []>} : vector<8x512xbf16>, vector<512x128xbf16>, vector<8x128xf32> -> vector<8x128xf32>
    %c0_21 = arith.constant 0 : index
    %c0_22 = arith.constant 0 : index
    %27 = vector.load %arg9[%c0_21, %c0_22] : memref<1x128xf32, #tpu.memory_space<vmem>>, vector<1x128xf32>
    %28 = vector.broadcast %27 : vector<1x128xf32> to vector<8x128xf32>
    %29 = arith.addf %26, %28 : vector<8x128xf32>
    %c0_23 = arith.constant 0 : index
    %c0_24 = arith.constant 0 : index
    %30 = vector.load %arg10[%c0_23, %c0_24] : memref<8x128xf32, #tpu.memory_space<vmem>>, vector<8x128xf32>
    tpu.vector_store %arg10[%c0_23, %c0_24], %29 {strides = array<i32>} : memref<8x128xf32, #tpu.memory_space<vmem>>, vector<8x128xf32>,
    return
  }
  func.func @transform_0(%arg0: i32) -> (i32, i32) {
    %c0_i32 = arith.constant 0 : i32
    %c0_i32_0 = arith.constant 0 : i32
    return %arg0, %c0_i32 : i32, i32
  }
  func.func @transform_1(%arg0: i32) -> (i32, i32) {
    %c0_i32 = arith.constant 0 : i32
    %c0_i32_0 = arith.constant 0 : i32
    %c0_i32_1 = arith.constant 0 : i32
    return %c0_i32, %c0_i32_0 : i32, i32
  }
  func.func @transform_2(%arg0: i32) -> (i32, i32) {
    %c0_i32 = arith.constant 0 : i32
    %c0_i32_0 = arith.constant 0 : i32
    %c0_i32_1 = arith.constant 0 : i32
    return %c0_i32, %c0_i32_0 : i32, i32
  }
  func.func @transform_3(%arg0: i32) -> (i32, i32) {
    %c0_i32 = arith.constant 0 : i32
    %c0_i32_0 = arith.constant 0 : i32
    %c0_i32_1 = arith.constant 0 : i32
    return %c0_i32, %c0_i32_0 : i32, i32
  }
  func.func @transform_4(%arg0: i32) -> (i32, i32) {
    %c0_i32 = arith.constant 0 : i32
    %c0_i32_0 = arith.constant 0 : i32
    %c0_i32_1 = arith.constant 0 : i32
    return %c0_i32, %c0_i32_0 : i32, i32
  }
  func.func @transform_5(%arg0: i32) -> (i32, i32) {
    %c0_i32 = arith.constant 0 : i32
    %c0_i32_0 = arith.constant 0 : i32
    %c0_i32_1 = arith.constant 0 : i32
    return %c0_i32, %c0_i32_0 : i32, i32
  }
  func.func @transform_6(%arg0: i32) -> (i32, i32) {
    %c0_i32 = arith.constant 0 : i32
    %c0_i32_0 = arith.constant 0 : i32
    %c0_i32_1 = arith.constant 0 : i32
    return %c0_i32, %c0_i32_0 : i32, i32
  }
  func.func @transform_7(%arg0: i32) -> (i32, i32) {
    %c0_i32 = arith.constant 0 : i32
    %c0_i32_0 = arith.constant 0 : i32
    %c0_i32_1 = arith.constant 0 : i32
    return %c0_i32, %c0_i32_0 : i32, i32
  }
  func.func @transform_8(%arg0: i32) -> (i32, i32) {
    %c0_i32 = arith.constant 0 : i32
    %c0_i32_0 = arith.constant 0 : i32
    %c0_i32_1 = arith.constant 0 : i32
    return %c0_i32, %c0_i32_0 : i32, i32
  }
  func.func @transform_9(%arg0: i32) -> (i32, i32) {
    %c0_i32 = arith.constant 0 : i32
    %c0_i32_0 = arith.constant 0 : i32
    return %arg0, %c0_i32 : i32, i32
  }
}

</mosaic_0001>

<llo_original>
// kernel: actor_critic_forward.1
$region0: #{actor_critic_forward.1}
  #allocation0 [shape = 'u32[]', space=smem, size = 0x4, offset = 0x4, fixed_abs, tag = 'smem constant byte address 0x4 - core index']
  #allocation1 [shape = 'u32[144,128]{1,0:T(1,128)}', space=vmem, size = 0x12000, scoped, tag = 'internal scratch']
  %s0 = inlined_call_operand.vmem [shape: bf16[8,32], index: 0, kind: input, shape index: {}]
  %s1 = inlined_call_operand.hbm [shape: bf16[32,256], index: 1, kind: input, shape index: {}]
  %s2 = inlined_call_operand.vmem [shape: f32[1,256], index: 2, kind: input, shape index: {}]
  %s3 = inlined_call_operand.hbm [shape: bf16[256,256], index: 3, kind: input, shape index: {}]
  %s4 = inlined_call_operand.vmem [shape: f32[1,256], index: 4, kind: input, shape index: {}]
  %s5 = inlined_call_operand.hbm [shape: bf16[256,512], index: 5, kind: input, shape index: {}]
  %s6 = inlined_call_operand.vmem [shape: f32[1,512], index: 6, kind: input, shape index: {}]
  %s7 = inlined_call_operand.hbm [shape: bf16[512,128], index: 7, kind: input, shape index: {}]
  %s8 = inlined_call_operand.vmem [shape: f32[1,128], index: 8, kind: input, shape index: {}]
  %s9 = inlined_call_operand.vmem [shape: f32[8,128], index: 9, kind: output, shape index: {}]
  %s10 = sld [smem:[#allocation0]]
  $region62: #{actor_critic_forward.1} parent=0
    _
  %s12 = ssub.s32 1, %s10
  %s13 = scalar_select 0, %s12, %s10
  $region1: #{actor_critic_forward.1} parent=0
    #allocation2 [shape = 'u8[16384]{0}', space=vmem, size = 0x4000, scoped, tag = 'input window, operand 1, single buffered']
    #allocation3 [shape = 's32[1]{0}', space=sflag, size = 0x4, scoped, tag = 'scoped memory for actor_critic_forward.1']
    #allocation4 [shape = 'u8[131072]{0}', space=vmem, size = 0x20000, scoped, tag = 'input window, operand 3, single buffered']
    #allocation5 [shape = 's32[1]{0}', space=sflag, size = 0x4, scoped, tag = 'scoped memory for actor_critic_forward.1']
    #allocation6 [shape = 'u8[262144]{0}', space=vmem, size = 0x40000, scoped, tag = 'input window, operand 5, single buffered']
    #allocation7 [shape = 'u8[131072]{0}', space=vmem, size = 0x20000, scoped, tag = 'input window, operand 7, single buffered']
    #allocation8 [shape = 's32[1]{0}', space=sflag, size = 0x4, scoped, tag = 'scoped memory for actor_critic_forward.1']
    %14 = vsyncpa [#allocation3], 0
    %15 = vsyncpa [#allocation5], 0
    %16 = vsyncpa [#allocation8], 0
    // Predicated region
    $region2: #{actor_critic_forward.1} parent=1 // pred_check
      _
    $region3: #{actor_critic_forward.1} parent=1 // pred_check_branch
      %18 = sbr.rel (0) target = $region5
    $region4: #{actor_critic_forward.1} parent=1 // pred_region
      _
    $region5: #{actor_critic_forward.1} parent=1 // pred_fallthru
      _
    // Predicated region
    $region6: #{actor_critic_forward.1} parent=1 // pred_check
      _
    $region7: #{actor_critic_forward.1} parent=1 // pred_check_branch
      %20 = sbr.rel (0) target = $region9
    $region8: #{actor_critic_forward.1} parent=1 // pred_region
      %s22 = ssub.s32 512, 512
      %23 = vsyncadd [#allocation3], %s22
      %s24 = sshll.u32 [#allocation2], 4
      %s25 = int_to_ptr.vmem [resolvable:$true] %s24
      %30 = dma.hbm_to_vmem [thread:$0]  %s1, 512, %s25, [#allocation3], 128, 128, 8
    $region9: #{actor_critic_forward.1} parent=1 // pred_fallthru
      _
    // Predicated region
    $region10: #{actor_critic_forward.1} parent=1 // pred_check
      _
    $region11: #{actor_critic_forward.1} parent=1 // pred_check_branch
      %32 = sbr.rel (0) target = $region13
    $region12: #{actor_critic_forward.1} parent=1 // pred_region
      _
    $region13: #{actor_critic_forward.1} parent=1 // pred_fallthru
      _
    // Predicated region
    $region14: #{actor_critic_forward.1} parent=1 // pred_check
      _
    $region15: #{actor_critic_forward.1} parent=1 // pred_check_branch
      %34 = sbr.rel (0) target = $region17
    $region16: #{actor_critic_forward.1} parent=1 // pred_region
      %s36 = ssub.s32 4096, 4096
      %37 = vsyncadd [#allocation5], %s36
      %s38 = sshll.u32 [#allocation4], 4
      %s39 = int_to_ptr.vmem [resolvable:$true] %s38
      %44 = dma.hbm_to_vmem [thread:$0]  %s3, 4096, %s39, [#allocation5], 128, 128, 8
    $region17: #{actor_critic_forward.1} parent=1 // pred_fallthru
      _
    // Predicated region
    $region18: #{actor_critic_forward.1} parent=1 // pred_check
      _
    $region19: #{actor_critic_forward.1} parent=1 // pred_check_branch
      %46 = sbr.rel (0) target = $region21
    $region20: #{actor_critic_forward.1} parent=1 // pred_region
      _
    $region21: #{actor_critic_forward.1} parent=1 // pred_fallthru
      _
    // Predicated region
    $region22: #{actor_critic_forward.1} parent=1 // pred_check
      _
    $region23: #{actor_critic_forward.1} parent=1 // pred_check_branch
      %48 = sbr.rel (0) target = $region25
    $region24: #{actor_critic_forward.1} parent=1 // pred_region
      %s50 = ssub.s32 8192, 8192
      %51 = vsyncadd [#allocation5], %s50
      %s52 = sshll.u32 [#allocation6], 4
      %s53 = int_to_ptr.vmem [resolvable:$true] %s52
      %58 = dma.hbm_to_vmem [thread:$0]  %s5, 8192, %s53, [#allocation5], 256, 256, 16
    $region25: #{actor_critic_forward.1} parent=1 // pred_fallthru
      _
    // Predicated region
    $region26: #{actor_critic_forward.1} parent=1 // pred_check
      _
    $region27: #{actor_critic_forward.1} parent=1 // pred_check_branch
      %60 = sbr.rel (0) target = $region29
    $region28: #{actor_critic_forward.1} parent=1 // pred_region
      _
    $region29: #{actor_critic_forward.1} parent=1 // pred_fallthru
      _
    // Predicated region
    $region30: #{actor_critic_forward.1} parent=1 // pred_check
      _
    $region31: #{actor_critic_forward.1} parent=1 // pred_check_branch
      %62 = sbr.rel (0) target = $region33
    $region32: #{actor_critic_forward.1} parent=1 // pred_region
      %s64 = ssub.s32 4096, 4096
      %65 = vsyncadd [#allocation8], %s64
      %s66 = sshll.u32 [#allocation7], 4
      %s67 = int_to_ptr.vmem [resolvable:$true] %s66
      %72 = dma.hbm_to_vmem [thread:$0]  %s7, 4096, %s67, [#allocation8], 64, 64, 4
    $region33: #{actor_critic_forward.1} parent=1 // pred_fallthru
      _
    // Predicated region
    $region34: #{actor_critic_forward.1} parent=1 // pred_check
      _
    $region35: #{actor_critic_forward.1} parent=1 // pred_check_branch
      %74 = sbr.rel (0) target = $region37
    $region36: #{actor_critic_forward.1} parent=1 // pred_region
      _
    $region37: #{actor_critic_forward.1} parent=1 // pred_fallthru
      _
    // Predicated region
    $region38: #{actor_critic_forward.1} parent=1 // pred_check
      _
    $region39: #{actor_critic_forward.1} parent=1 // pred_check_branch
      %76 = sbr.rel (0) target = $region41
    $region40: #{actor_critic_forward.1} parent=1 // pred_region
      %77 = dma.done [#allocation3], 512
    $region41: #{actor_critic_forward.1} parent=1 // pred_fallthru
      _
    // Predicated region
    $region42: #{actor_critic_forward.1} parent=1 // pred_check
      _
    $region43: #{actor_critic_forward.1} parent=1 // pred_check_branch
      %79 = sbr.rel (0) target = $region45
    $region44: #{actor_critic_forward.1} parent=1 // pred_region
      %80 = dma.done [#allocation5], 4096
    $region45: #{actor_critic_forward.1} parent=1 // pred_fallthru
      _
    // Predicated region
    $region46: #{actor_critic_forward.1} parent=1 // pred_check
      _
    $region47: #{actor_critic_forward.1} parent=1 // pred_check_branch
      %82 = sbr.rel (0) target = $region49
    $region48: #{actor_critic_forward.1} parent=1 // pred_region
      %83 = dma.done [#allocation5], 8192
    $region49: #{actor_critic_forward.1} parent=1 // pred_fallthru
      _
    // Predicated region
    $region50: #{actor_critic_forward.1} parent=1 // pred_check
      _
    $region51: #{actor_critic_forward.1} parent=1 // pred_check_branch
      %85 = sbr.rel (0) target = $region53
    $region52: #{actor_critic_forward.1} parent=1 // pred_region
      %86 = dma.done [#allocation8], 4096
    $region53: #{actor_critic_forward.1} parent=1 // pred_fallthru
      _
    %v88 = vld [vmem:[%s0] sm:$0xf]
    %v89 = vld [vmem:[#allocation2] sm:$0xff]
    %v90 = vld [vmem:[#allocation2 + $0x8] sm:$0xff]
    %v91 = vld [vmem:[#allocation2 + $0x10] sm:$0xff]
    %v92 = vld [vmem:[#allocation2 + $0x18] sm:$0xff]
    %v93 = vld [vmem:[%s2] sm:$0x3]
    %v95 = vlaneseq
    %v96 = vshrl.u32 %v95, 7
    %v97 = vsub.s32 0, %v96
    %v98 = vrot.slane %v93, %v97
    %v99 = vlaneseq
    %v100 = vshrl.u32 %v99, 7
    %v101 = vsub.s32 1, %v100
    %v102 = vrot.slane %v93, %v101
    %v109 = vunpack.c.l.b16 %v89
    %v110 = vunpack.c.h.b16 %v89
    %v111 = vunpack.c.l.b16 %v90
    %v112 = vunpack.c.h.b16 %v90
    %v113 = vunpack.c.l.b16 %v91
    %v114 = vunpack.c.h.b16 %v91
    %v115 = vunpack.c.l.b16 %v92
    %v116 = vunpack.c.h.b16 %v92
    %v117 = vpack.c.b16 %v111, %v109
    %v118 = vpack.c.b16 %v112, %v110
    %v119 = vpack.c.b16 %v115, %v113
    %v120 = vpack.c.b16 %v116, %v114
    %vm125 = vcmask 261120
    %v127 = vsel %vm125, %v88, 0
    %129 = vmatprep.subr.bf16.mxu0 %v118
    %130 = vmatpush1.bf16.msra.mxu0 %v117
    %131 = vmatprep.subr.bf16.mxu0 %v120
    %132 = vmatpush1.bf16.msra.mxu0 %v119
    %133 = vmatprep.subr.bf16.mxu0 0
    %134 = vmatpush1.bf16.msra.mxu0 0
    %135 = vmatprep.subr.bf16.mxu0 0
    %136 = vmatpush1.bf16.msra.mxu0 0
    %137 = vmatprep.subr.bf16.mxu0 0
    %138 = vmatpush1.bf16.msra.mxu0 0
    %139 = vmatprep.subr.bf16.mxu0 0
    %140 = vmatpush1.bf16.msra.mxu0 0
    %141 = vmatprep.subr.bf16.mxu0 0
    %142 = vmatpush1.bf16.msra.mxu0 0
    %143 = vmatprep.subr.bf16.mxu0 0
    %144 = vmatpush1.bf16.msra.mxu0 0
    %145 = vmatprep.subr.bf16.mxu0 0
    %146 = vmatpush1.bf16.msra.mxu0 0
    %147 = vmatprep.subr.bf16.mxu0 0
    %148 = vmatpush1.bf16.msra.mxu0 0
    %149 = vmatprep.subr.bf16.mxu0 0
    %150 = vmatpush1.bf16.msra.mxu0 0
    %151 = vmatprep.subr.bf16.mxu0 0
    %152 = vmatpush1.bf16.msra.mxu0 0
    %153 = vmatprep.subr.bf16.mxu0 0
    %154 = vmatpush1.bf16.msra.mxu0 0
    %155 = vmatprep.subr.bf16.mxu0 0
    %156 = vmatpush1.bf16.msra.mxu0 0
    %157 = vmatprep.subr.bf16.mxu0 0
    %158 = vmatpush1.bf16.msra.mxu0 0
    %159 = vmatprep.subr.bf16.mxu0 0
    %160 = vmatpush1.bf16.msra.mxu0 0
    %161 = vmatprep.mubr.bf16.mxu0 0
    %162 = vmatmul.mubr.bf16.gmra.mrb[0].mxu0 %v127
    %v163 = vpop.f32.mrb[0].mxu0
    %v164 = vadd.f32 %v98, %v163
    %v165 = vpop.f32.mrb[0].mxu0
    %v166 = vadd.f32 %v102, %v165
    %v167 = vpop.f32.mrb[0].mxu0
    %v168 = vpop.f32.mrb[0].mxu0
    %169 = vdwg.mxu0
    %v170 = vmax.f32 %v164, 0.0
    %v171 = vmax.f32 %v166, 0.0
    %v172 = vpack.c.bf16 %v170, %v170
    %v173 = vpack.c.bf16 %v171, %v171
    %v174 = vld [vmem:[#allocation4] sm:$0xff]
    %v175 = vld [vmem:[#allocation4 + $0x8] sm:$0xff]
    %v176 = vld [vmem:[#allocation4 + $0x10] sm:$0xff]
    %v177 = vld [vmem:[#allocation4 + $0x18] sm:$0xff]
    %v178 = vld [vmem:[#allocation4 + $0x20] sm:$0xff]
    %v179 = vld [vmem:[#allocation4 + $0x28] sm:$0xff]
    %v180 = vld [vmem:[#allocation4 + $0x30] sm:$0xff]
    %v181 = vld [vmem:[#allocation4 + $0x38] sm:$0xff]
    %v182 = vld [vmem:[#allocation4 + $0x40] sm:$0xff]
    %v183 = vld [vmem:[#allocation4 + $0x48] sm:$0xff]
    %v184 = vld [vmem:[#allocation4 + $0x50] sm:$0xff]
    %v185 = vld [vmem:[#allocation4 + $0x58] sm:$0xff]
    %v186 = vld [vmem:[#allocation4 + $0x60] sm:$0xff]
    %v187 = vld [vmem:[#allocation4 + $0x68] sm:$0xff]
    %v188 = vld [vmem:[#allocation4 + $0x70] sm:$0xff]
    %v189 = vld [vmem:[#allocation4 + $0x78] sm:$0xff]
    %v190 = vld [vmem:[#allocation4 + $0x80] sm:$0xff]
    %v191 = vld [vmem:[#allocation4 + $0x88] sm:$0xff]
    %v192 = vld [vmem:[#allocation4 + $0x90] sm:$0xff]
    %v193 = vld [vmem:[#allocation4 + $0x98] sm:$0xff]
    %v194 = vld [vmem:[#allocation4 + $0xa0] sm:$0xff]
    %v195 = vld [vmem:[#allocation4 + $0xa8] sm:$0xff]
    %v196 = vld [vmem:[#allocation4 + $0xb0] sm:$0xff]
    %v197 = vld [vmem:[#allocation4 + $0xb8] sm:$0xff]
    %v198 = vld [vmem:[#allocation4 + $0xc0] sm:$0xff]
    %v199 = vld [vmem:[#allocation4 + $0xc8] sm:$0xff]
    %v200 = vld [vmem:[#allocation4 + $0xd0] sm:$0xff]
    %v201 = vld [vmem:[#allocation4 + $0xd8] sm:$0xff]
    %v202 = vld [vmem:[#allocation4 + $0xe0] sm:$0xff]
    %v203 = vld [vmem:[#allocation4 + $0xe8] sm:$0xff]
    %v204 = vld [vmem:[#allocation4 + $0xf0] sm:$0xff]
    %v205 = vld [vmem:[#allocation4 + $0xf8] sm:$0xff]
    %v206 = vld [vmem:[%s4] sm:$0x3]
    %v208 = vlaneseq
    %v209 = vshrl.u32 %v208, 7
    %v210 = vsub.s32 0, %v209
    %v211 = vrot.slane %v206, %v210
    %v212 = vlaneseq
    %v213 = vshrl.u32 %v212, 7
    %v214 = vsub.s32 1, %v213
    %v215 = vrot.slane %v206, %v214
    %v250 = vunpack.c.l.b16 %v174
    %v251 = vunpack.c.h.b16 %v174
    %v252 = vunpack.c.l.b16 %v175
    %v253 = vunpack.c.h.b16 %v175
    %v254 = vunpack.c.l.b16 %v176
    %v255 = vunpack.c.h.b16 %v176
    %v256 = vunpack.c.l.b16 %v177
    %v257 = vunpack.c.h.b16 %v177
    %v258 = vunpack.c.l.b16 %v178
    %v259 = vunpack.c.h.b16 %v178
    %v260 = vunpack.c.l.b16 %v179
    %v261 = vunpack.c.h.b16 %v179
    %v262 = vunpack.c.l.b16 %v180
    %v263 = vunpack.c.h.b16 %v180
    %v264 = vunpack.c.l.b16 %v181
    %v265 = vunpack.c.h.b16 %v181
    %v266 = vunpack.c.l.b16 %v182
    %v267 = vunpack.c.h.b16 %v182
    %v268 = vunpack.c.l.b16 %v183
    %v269 = vunpack.c.h.b16 %v183
    %v270 = vunpack.c.l.b16 %v184
    %v271 = vunpack.c.h.b16 %v184
    %v272 = vunpack.c.l.b16 %v185
    %v273 = vunpack.c.h.b16 %v185
    %v274 = vunpack.c.l.b16 %v186
    %v275 = vunpack.c.h.b16 %v186
    %v276 = vunpack.c.l.b16 %v187
    %v277 = vunpack.c.h.b16 %v187
    %v278 = vunpack.c.l.b16 %v188
    %v279 = vunpack.c.h.b16 %v188
    %v280 = vunpack.c.l.b16 %v189
    %v281 = vunpack.c.h.b16 %v189
    %v282 = vunpack.c.l.b16 %v190
    %v283 = vunpack.c.h.b16 %v190
    %v284 = vunpack.c.l.b16 %v191
    %v285 = vunpack.c.h.b16 %v191
    %v286 = vunpack.c.l.b16 %v192
    %v287 = vunpack.c.h.b16 %v192
    %v288 = vunpack.c.l.b16 %v193
    %v289 = vunpack.c.h.b16 %v193
    %v290 = vunpack.c.l.b16 %v194
    %v291 = vunpack.c.h.b16 %v194
    %v292 = vunpack.c.l.b16 %v195
    %v293 = vunpack.c.h.b16 %v195
    %v294 = vunpack.c.l.b16 %v196
    %v295 = vunpack.c.h.b16 %v196
    %v296 = vunpack.c.l.b16 %v197
    %v297 = vunpack.c.h.b16 %v197
    %v298 = vunpack.c.l.b16 %v198
    %v299 = vunpack.c.h.b16 %v198
    %v300 = vunpack.c.l.b16 %v199
    %v301 = vunpack.c.h.b16 %v199
    %v302 = vunpack.c.l.b16 %v200
    %v303 = vunpack.c.h.b16 %v200
    %v304 = vunpack.c.l.b16 %v201
    %v305 = vunpack.c.h.b16 %v201
    %v306 = vunpack.c.l.b16 %v202
    %v307 = vunpack.c.h.b16 %v202
    %v308 = vunpack.c.l.b16 %v203
    %v309 = vunpack.c.h.b16 %v203
    %v310 = vunpack.c.l.b16 %v204
    %v311 = vunpack.c.h.b16 %v204
    %v312 = vunpack.c.l.b16 %v205
    %v313 = vunpack.c.h.b16 %v205
    %v314 = vpack.c.b16 %v252, %v250
    %v315 = vpack.c.b16 %v253, %v251
    %v316 = vpack.c.b16 %v256, %v254
    %v317 = vpack.c.b16 %v257, %v255
    %v318 = vpack.c.b16 %v260, %v258
    %v319 = vpack.c.b16 %v261, %v259
    %v320 = vpack.c.b16 %v264, %v262
    %v321 = vpack.c.b16 %v265, %v263
    %v322 = vpack.c.b16 %v268, %v266
    %v323 = vpack.c.b16 %v269, %v267
    %v324 = vpack.c.b16 %v272, %v270
    %v325 = vpack.c.b16 %v273, %v271
    %v326 = vpack.c.b16 %v276, %v274
    %v327 = vpack.c.b16 %v277, %v275
    %v328 = vpack.c.b16 %v280, %v278
    %v329 = vpack.c.b16 %v281, %v279
    %v330 = vpack.c.b16 %v284, %v282
    %v331 = vpack.c.b16 %v285, %v283
    %v332 = vpack.c.b16 %v288, %v286
    %v333 = vpack.c.b16 %v289, %v287
    %v334 = vpack.c.b16 %v292, %v290
    %v335 = vpack.c.b16 %v293, %v291
    %v336 = vpack.c.b16 %v296, %v294
    %v337 = vpack.c.b16 %v297, %v295
    %v338 = vpack.c.b16 %v300, %v298
    %v339 = vpack.c.b16 %v301, %v299
    %v340 = vpack.c.b16 %v304, %v302
    %v341 = vpack.c.b16 %v305, %v303
    %v342 = vpack.c.b16 %v308, %v306
    %v343 = vpack.c.b16 %v309, %v307
    %v344 = vpack.c.b16 %v312, %v310
    %v345 = vpack.c.b16 %v313, %v311
    %378 = vmatprep.subr.bf16.mxu0 %v315
    %379 = vmatpush1.bf16.msra.mxu0 %v314
    %380 = vmatprep.subr.bf16.mxu0 %v317
    %381 = vmatpush1.bf16.msra.mxu0 %v316
    %382 = vmatprep.subr.bf16.mxu0 %v319
    %383 = vmatpush1.bf16.msra.mxu0 %v318
    %384 = vmatprep.subr.bf16.mxu0 %v321
    %385 = vmatpush1.bf16.msra.mxu0 %v320
    %386 = vmatprep.subr.bf16.mxu0 %v323
    %387 = vmatpush1.bf16.msra.mxu0 %v322
    %388 = vmatprep.subr.bf16.mxu0 %v325
    %389 = vmatpush1.bf16.msra.mxu0 %v324
    %390 = vmatprep.subr.bf16.mxu0 %v327
    %391 = vmatpush1.bf16.msra.mxu0 %v326
    %392 = vmatprep.subr.bf16.mxu0 %v329
    %393 = vmatpush1.bf16.msra.mxu0 %v328
    %394 = vmatprep.subr.bf16.mxu0 %v331
    %395 = vmatpush1.bf16.msra.mxu0 %v330
    %396 = vmatprep.subr.bf16.mxu0 %v333
    %397 = vmatpush1.bf16.msra.mxu0 %v332
    %398 = vmatprep.subr.bf16.mxu0 %v335
    %399 = vmatpush1.bf16.msra.mxu0 %v334
    %400 = vmatprep.subr.bf16.mxu0 %v337
    %401 = vmatpush1.bf16.msra.mxu0 %v336
    %402 = vmatprep.subr.bf16.mxu0 %v339
    %403 = vmatpush1.bf16.msra.mxu0 %v338
    %404 = vmatprep.subr.bf16.mxu0 %v341
    %405 = vmatpush1.bf16.msra.mxu0 %v340
    %406 = vmatprep.subr.bf16.mxu0 %v343
    %407 = vmatpush1.bf16.msra.mxu0 %v342
    %408 = vmatprep.subr.bf16.mxu0 %v345
    %409 = vmatpush1.bf16.msra.mxu0 %v344
    %410 = vmatprep.mubr.bf16.mxu0 %v173
    %411 = vmatmul.mubr.bf16.gmra.mrb[0].mxu0 %v172
    %v412 = vpop.f32.mrb[0].mxu0
    %v413 = vadd.f32 %v211, %v412
    %v414 = vpop.f32.mrb[0].mxu0
    %v415 = vadd.f32 %v215, %v414
    %v416 = vpop.f32.mrb[0].mxu0
    %v417 = vpop.f32.mrb[0].mxu0
    %418 = vdwg.mxu0
    %v419 = vmax.f32 %v413, 0.0
    %v420 = vmax.f32 %v415, 0.0
    %v421 = vpack.c.bf16 %v419, %v419
    %v422 = vpack.c.bf16 %v420, %v420
    %v423 = vld [vmem:[#allocation6] sm:$0xff]
    %v424 = vld [vmem:[#allocation6 + $0x8] sm:$0xff]
    %v425 = vld [vmem:[#allocation6 + $0x10] sm:$0xff]
    %v426 = vld [vmem:[#allocation6 + $0x18] sm:$0xff]
    %v427 = vld [vmem:[#allocation6 + $0x20] sm:$0xff]
    %v428 = vld [vmem:[#allocation6 + $0x28] sm:$0xff]
    %v429 = vld [vmem:[#allocation6 + $0x30] sm:$0xff]
    %v430 = vld [vmem:[#allocation6 + $0x38] sm:$0xff]
    %v431 = vld [vmem:[#allocation6 + $0x40] sm:$0xff]
    %v432 = vld [vmem:[#allocation6 + $0x48] sm:$0xff]
    %v433 = vld [vmem:[#allocation6 + $0x50] sm:$0xff]
    %v434 = vld [vmem:[#allocation6 + $0x58] sm:$0xff]
    %v435 = vld [vmem:[#allocation6 + $0x60] sm:$0xff]
    %v436 = vld [vmem:[#allocation6 + $0x68] sm:$0xff]
    %v437 = vld [vmem:[#allocation6 + $0x70] sm:$0xff]
    %v438 = vld [vmem:[#allocation6 + $0x78] sm:$0xff]
    %v439 = vld [vmem:[#allocation6 + $0x80] sm:$0xff]
    %v440 = vld [vmem:[#allocation6 + $0x88] sm:$0xff]
    %v441 = vld [vmem:[#allocation6 + $0x90] sm:$0xff]
    %v442 = vld [vmem:[#allocation6 + $0x98] sm:$0xff]
    %v443 = vld [vmem:[#allocation6 + $0xa0] sm:$0xff]
    %v444 = vld [vmem:[#allocation6 + $0xa8] sm:$0xff]
    %v445 = vld [vmem:[#allocation6 + $0xb0] sm:$0xff]
    %v446 = vld [vmem:[#allocation6 + $0xb8] sm:$0xff]
    %v447 = vld [vmem:[#allocation6 + $0xc0] sm:$0xff]
    %v448 = vld [vmem:[#allocation6 + $0xc8] sm:$0xff]
    %v449 = vld [vmem:[#allocation6 + $0xd0] sm:$0xff]
    %v450 = vld [vmem:[#allocation6 + $0xd8] sm:$0xff]
    %v451 = vld [vmem:[#allocation6 + $0xe0] sm:$0xff]
    %v452 = vld [vmem:[#allocation6 + $0xe8] sm:$0xff]
    %v453 = vld [vmem:[#allocation6 + $0xf0] sm:$0xff]
    %v454 = vld [vmem:[#allocation6 + $0xf8] sm:$0xff]
    %v455 = vld [vmem:[#allocation6 + $0x100] sm:$0xff]
    %v456 = vld [vmem:[#allocation6 + $0x108] sm:$0xff]
    %v457 = vld [vmem:[#allocation6 + $0x110] sm:$0xff]
    %v458 = vld [vmem:[#allocation6 + $0x118] sm:$0xff]
    %v459 = vld [vmem:[#allocation6 + $0x120] sm:$0xff]
    %v460 = vld [vmem:[#allocation6 + $0x128] sm:$0xff]
    %v461 = vld [vmem:[#allocation6 + $0x130] sm:$0xff]
    %v462 = vld [vmem:[#allocation6 + $0x138] sm:$0xff]
    %v463 = vld [vmem:[#allocation6 + $0x140] sm:$0xff]
    %v464 = vld [vmem:[#allocation6 + $0x148] sm:$0xff]
    %v465 = vld [vmem:[#allocation6 + $0x150] sm:$0xff]
    %v466 = vld [vmem:[#allocation6 + $0x158] sm:$0xff]
    %v467 = vld [vmem:[#allocation6 + $0x160] sm:$0xff]
    %v468 = vld [vmem:[#allocation6 + $0x168] sm:$0xff]
    %v469 = vld [vmem:[#allocation6 + $0x170] sm:$0xff]
    %v470 = vld [vmem:[#allocation6 + $0x178] sm:$0xff]
    %v471 = vld [vmem:[#allocation6 + $0x180] sm:$0xff]
    %v472 = vld [vmem:[#allocation6 + $0x188] sm:$0xff]
    %v473 = vld [vmem:[#allocation6 + $0x190] sm:$0xff]
    %v474 = vld [vmem:[#allocation6 + $0x198] sm:$0xff]
    %v475 = vld [vmem:[#allocation6 + $0x1a0] sm:$0xff]
    %v476 = vld [vmem:[#allocation6 + $0x1a8] sm:$0xff]
    %v477 = vld [vmem:[#allocation6 + $0x1b0] sm:$0xff]
    %v478 = vld [vmem:[#allocation6 + $0x1b8] sm:$0xff]
    %v479 = vld [vmem:[#allocation6 + $0x1c0] sm:$0xff]
    %v480 = vld [vmem:[#allocation6 + $0x1c8] sm:$0xff]
    %v481 = vld [vmem:[#allocation6 + $0x1d0] sm:$0xff]
    %v482 = vld [vmem:[#allocation6 + $0x1d8] sm:$0xff]
    %v483 = vld [vmem:[#allocation6 + $0x1e0] sm:$0xff]
    %v484 = vld [vmem:[#allocation6 + $0x1e8] sm:$0xff]
    %v485 = vld [vmem:[#allocation6 + $0x1f0] sm:$0xff]
    %v486 = vld [vmem:[#allocation6 + $0x1f8] sm:$0xff]
    %v487 = vld [vmem:[%s6] sm:$0xf]
    %v489 = vlaneseq
    %v490 = vshrl.u32 %v489, 7
    %v491 = vsub.s32 0, %v490
    %v492 = vrot.slane %v487, %v491
    %v493 = vlaneseq
    %v494 = vshrl.u32 %v493, 7
    %v495 = vsub.s32 1, %v494
    %v496 = vrot.slane %v487, %v495
    %v497 = vlaneseq
    %v498 = vshrl.u32 %v497, 7
    %v499 = vsub.s32 2, %v498
    %v500 = vrot.slane %v487, %v499
    %v501 = vlaneseq
    %v502 = vshrl.u32 %v501, 7
    %v503 = vsub.s32 3, %v502
    %v504 = vrot.slane %v487, %v503
    %v573 = vunpack.c.l.b16 %v423
    %v574 = vunpack.c.h.b16 %v423
    %v575 = vunpack.c.l.b16 %v424
    %v576 = vunpack.c.h.b16 %v424
    %v577 = vunpack.c.l.b16 %v425
    %v578 = vunpack.c.h.b16 %v425
    %v579 = vunpack.c.l.b16 %v426
    %v580 = vunpack.c.h.b16 %v426
    %v581 = vunpack.c.l.b16 %v427
    %v582 = vunpack.c.h.b16 %v427
    %v583 = vunpack.c.l.b16 %v428
    %v584 = vunpack.c.h.b16 %v428
    %v585 = vunpack.c.l.b16 %v429
    %v586 = vunpack.c.h.b16 %v429
    %v587 = vunpack.c.l.b16 %v430
    %v588 = vunpack.c.h.b16 %v430
    %v589 = vunpack.c.l.b16 %v431
    %v590 = vunpack.c.h.b16 %v431
    %v591 = vunpack.c.l.b16 %v432
    %v592 = vunpack.c.h.b16 %v432
    %v593 = vunpack.c.l.b16 %v433
    %v594 = vunpack.c.h.b16 %v433
    %v595 = vunpack.c.l.b16 %v434
    %v596 = vunpack.c.h.b16 %v434
    %v597 = vunpack.c.l.b16 %v435
    %v598 = vunpack.c.h.b16 %v435
    %v599 = vunpack.c.l.b16 %v436
    %v600 = vunpack.c.h.b16 %v436
    %v601 = vunpack.c.l.b16 %v437
    %v602 = vunpack.c.h.b16 %v437
    %v603 = vunpack.c.l.b16 %v438
    %v604 = vunpack.c.h.b16 %v438
    %v605 = vunpack.c.l.b16 %v439
    %v606 = vunpack.c.h.b16 %v439
    %v607 = vunpack.c.l.b16 %v440
    %v608 = vunpack.c.h.b16 %v440
    %v609 = vunpack.c.l.b16 %v441
    %v610 = vunpack.c.h.b16 %v441
    %v611 = vunpack.c.l.b16 %v442
    %v612 = vunpack.c.h.b16 %v442
    %v613 = vunpack.c.l.b16 %v443
    %v614 = vunpack.c.h.b16 %v443
    %v615 = vunpack.c.l.b16 %v444
    %v616 = vunpack.c.h.b16 %v444
    %v617 = vunpack.c.l.b16 %v445
    %v618 = vunpack.c.h.b16 %v445
    %v619 = vunpack.c.l.b16 %v446
    %v620 = vunpack.c.h.b16 %v446
    %v621 = vunpack.c.l.b16 %v447
    %v622 = vunpack.c.h.b16 %v447
    %v623 = vunpack.c.l.b16 %v448
    %v624 = vunpack.c.h.b16 %v448
    %v625 = vunpack.c.l.b16 %v449
    %v626 = vunpack.c.h.b16 %v449
    %v627 = vunpack.c.l.b16 %v450
    %v628 = vunpack.c.h.b16 %v450
    %v629 = vunpack.c.l.b16 %v451
    %v630 = vunpack.c.h.b16 %v451
    %v631 = vunpack.c.l.b16 %v452
    %v632 = vunpack.c.h.b16 %v452
    %v633 = vunpack.c.l.b16 %v453
    %v634 = vunpack.c.h.b16 %v453
    %v635 = vunpack.c.l.b16 %v454
    %v636 = vunpack.c.h.b16 %v454
    %v637 = vunpack.c.l.b16 %v455
    %v638 = vunpack.c.h.b16 %v455
    %v639 = vunpack.c.l.b16 %v456
    %v640 = vunpack.c.h.b16 %v456
    %v641 = vunpack.c.l.b16 %v457
    %v642 = vunpack.c.h.b16 %v457
    %v643 = vunpack.c.l.b16 %v458
    %v644 = vunpack.c.h.b16 %v458
    %v645 = vunpack.c.l.b16 %v459
    %v646 = vunpack.c.h.b16 %v459
    %v647 = vunpack.c.l.b16 %v460
    %v648 = vunpack.c.h.b16 %v460
    %v649 = vunpack.c.l.b16 %v461
    %v650 = vunpack.c.h.b16 %v461
    %v651 = vunpack.c.l.b16 %v462
    %v652 = vunpack.c.h.b16 %v462
    %v653 = vunpack.c.l.b16 %v463
    %v654 = vunpack.c.h.b16 %v463
    %v655 = vunpack.c.l.b16 %v464
    %v656 = vunpack.c.h.b16 %v464
    %v657 = vunpack.c.l.b16 %v465
    %v658 = vunpack.c.h.b16 %v465
    %v659 = vunpack.c.l.b16 %v466
    %v660 = vunpack.c.h.b16 %v466
    %v661 = vunpack.c.l.b16 %v467
    %v662 = vunpack.c.h.b16 %v467
    %v663 = vunpack.c.l.b16 %v468
    %v664 = vunpack.c.h.b16 %v468
    %v665 = vunpack.c.l.b16 %v469
    %v666 = vunpack.c.h.b16 %v469
    %v667 = vunpack.c.l.b16 %v470
    %v668 = vunpack.c.h.b16 %v470
    %v669 = vunpack.c.l.b16 %v471
    %v670 = vunpack.c.h.b16 %v471
    %v671 = vunpack.c.l.b16 %v472
    %v672 = vunpack.c.h.b16 %v472
    %v673 = vunpack.c.l.b16 %v473
    %v674 = vunpack.c.h.b16 %v473
    %v675 = vunpack.c.l.b16 %v474
    %v676 = vunpack.c.h.b16 %v474
    %v677 = vunpack.c.l.b16 %v475
    %v678 = vunpack.c.h.b16 %v475
    %v679 = vunpack.c.l.b16 %v476
    %v680 = vunpack.c.h.b16 %v476
    %v681 = vunpack.c.l.b16 %v477
    %v682 = vunpack.c.h.b16 %v477
    %v683 = vunpack.c.l.b16 %v478
    %v684 = vunpack.c.h.b16 %v478
    %v685 = vunpack.c.l.b16 %v479
    %v686 = vunpack.c.h.b16 %v479
    %v687 = vunpack.c.l.b16 %v480
    %v688 = vunpack.c.h.b16 %v480
    %v689 = vunpack.c.l.b16 %v481
    %v690 = vunpack.c.h.b16 %v481
    %v691 = vunpack.c.l.b16 %v482
    %v692 = vunpack.c.h.b16 %v482
    %v693 = vunpack.c.l.b16 %v483
    %v694 = vunpack.c.h.b16 %v483
    %v695 = vunpack.c.l.b16 %v484
    %v696 = vunpack.c.h.b16 %v484
    %v697 = vunpack.c.l.b16 %v485
    %v698 = vunpack.c.h.b16 %v485
    %v699 = vunpack.c.l.b16 %v486
    %v700 = vunpack.c.h.b16 %v486
    %v701 = vpack.c.b16 %v577, %v573
    %v702 = vpack.c.b16 %v578, %v574
    %v703 = vpack.c.b16 %v579, %v575
    %v704 = vpack.c.b16 %v580, %v576
    %v705 = vpack.c.b16 %v585, %v581
    %v706 = vpack.c.b16 %v586, %v582
    %v707 = vpack.c.b16 %v587, %v583
    %v708 = vpack.c.b16 %v588, %v584
    %v709 = vpack.c.b16 %v593, %v589
    %v710 = vpack.c.b16 %v594, %v590
    %v711 = vpack.c.b16 %v595, %v591
    %v712 = vpack.c.b16 %v596, %v592
    %v713 = vpack.c.b16 %v601, %v597
    %v714 = vpack.c.b16 %v602, %v598
    %v715 = vpack.c.b16 %v603, %v599
    %v716 = vpack.c.b16 %v604, %v600
    %v717 = vpack.c.b16 %v609, %v605
    %v718 = vpack.c.b16 %v610, %v606
    %v719 = vpack.c.b16 %v611, %v607
    %v720 = vpack.c.b16 %v612, %v608
    %v721 = vpack.c.b16 %v617, %v613
    %v722 = vpack.c.b16 %v618, %v614
    %v723 = vpack.c.b16 %v619, %v615
    %v724 = vpack.c.b16 %v620, %v616
    %v725 = vpack.c.b16 %v625, %v621
    %v726 = vpack.c.b16 %v626, %v622
    %v727 = vpack.c.b16 %v627, %v623
    %v728 = vpack.c.b16 %v628, %v624
    %v729 = vpack.c.b16 %v633, %v629
    %v730 = vpack.c.b16 %v634, %v630
    %v731 = vpack.c.b16 %v635, %v631
    %v732 = vpack.c.b16 %v636, %v632
    %v733 = vpack.c.b16 %v641, %v637
    %v734 = vpack.c.b16 %v642, %v638
    %v735 = vpack.c.b16 %v643, %v639
    %v736 = vpack.c.b16 %v644, %v640
    %v737 = vpack.c.b16 %v649, %v645
    %v738 = vpack.c.b16 %v650, %v646
    %v739 = vpack.c.b16 %v651, %v647
    %v740 = vpack.c.b16 %v652, %v648
    %v741 = vpack.c.b16 %v657, %v653
    %v742 = vpack.c.b16 %v658, %v654
    %v743 = vpack.c.b16 %v659, %v655
    %v744 = vpack.c.b16 %v660, %v656
    %v745 = vpack.c.b16 %v665, %v661
    %v746 = vpack.c.b16 %v666, %v662
    %v747 = vpack.c.b16 %v667, %v663
    %v748 = vpack.c.b16 %v668, %v664
    %v749 = vpack.c.b16 %v673, %v669
    %v750 = vpack.c.b16 %v674, %v670
    %v751 = vpack.c.b16 %v675, %v671
    %v752 = vpack.c.b16 %v676, %v672
    %v753 = vpack.c.b16 %v681, %v677
    %v754 = vpack.c.b16 %v682, %v678
    %v755 = vpack.c.b16 %v683, %v679
    %v756 = vpack.c.b16 %v684, %v680
    %v757 = vpack.c.b16 %v689, %v685
    %v758 = vpack.c.b16 %v690, %v686
    %v759 = vpack.c.b16 %v691, %v687
    %v760 = vpack.c.b16 %v692, %v688
    %v761 = vpack.c.b16 %v697, %v693
    %v762 = vpack.c.b16 %v698, %v694
    %v763 = vpack.c.b16 %v699, %v695
    %v764 = vpack.c.b16 %v700, %v696
    %829 = vmatprep.subr.bf16.mxu0 %v702
    %830 = vmatpush1.bf16.msra.mxu0 %v701
    %831 = vmatprep.subr.bf16.mxu0 %v706
    %832 = vmatpush1.bf16.msra.mxu0 %v705
    %833 = vmatprep.subr.bf16.mxu0 %v710
    %834 = vmatpush1.bf16.msra.mxu0 %v709
    %835 = vmatprep.subr.bf16.mxu0 %v714
    %836 = vmatpush1.bf16.msra.mxu0 %v713
    %837 = vmatprep.subr.bf16.mxu0 %v718
    %838 = vmatpush1.bf16.msra.mxu0 %v717
    %839 = vmatprep.subr.bf16.mxu0 %v722
    %840 = vmatpush1.bf16.msra.mxu0 %v721
    %841 = vmatprep.subr.bf16.mxu0 %v726
    %842 = vmatpush1.bf16.msra.mxu0 %v725
    %843 = vmatprep.subr.bf16.mxu0 %v730
    %844 = vmatpush1.bf16.msra.mxu0 %v729
    %845 = vmatprep.subr.bf16.mxu0 %v734
    %846 = vmatpush1.bf16.msra.mxu0 %v733
    %847 = vmatprep.subr.bf16.mxu0 %v738
    %848 = vmatpush1.bf16.msra.mxu0 %v737
    %849 = vmatprep.subr.bf16.mxu0 %v742
    %850 = vmatpush1.bf16.msra.mxu0 %v741
    %851 = vmatprep.subr.bf16.mxu0 %v746
    %852 = vmatpush1.bf16.msra.mxu0 %v745
    %853 = vmatprep.subr.bf16.mxu0 %v750
    %854 = vmatpush1.bf16.msra.mxu0 %v749
    %855 = vmatprep.subr.bf16.mxu0 %v754
    %856 = vmatpush1.bf16.msra.mxu0 %v753
    %857 = vmatprep.subr.bf16.mxu0 %v758
    %858 = vmatpush1.bf16.msra.mxu0 %v757
    %859 = vmatprep.subr.bf16.mxu0 %v762
    %860 = vmatpush1.bf16.msra.mxu0 %v761
    %861 = vmatprep.mubr.bf16.mxu0 %v422
    %862 = vmatmul.mubr.bf16.gmra.mrb[0].mxu0 %v421
    %v863 = vpop.f32.mrb[0].mxu0
    %v864 = vadd.f32 %v492, %v863
    %v865 = vpop.f32.mrb[0].mxu0
    %v866 = vadd.f32 %v496, %v865
    %v867 = vpop.f32.mrb[0].mxu0
    %v868 = vpop.f32.mrb[0].mxu0
    %869 = vdwg.mxu0
    %870 = vmatprep.subr.bf16.mxu0 %v704
    %871 = vmatpush1.bf16.msra.mxu0 %v703
    %872 = vmatprep.subr.bf16.mxu0 %v708
    %873 = vmatpush1.bf16.msra.mxu0 %v707
    %874 = vmatprep.subr.bf16.mxu0 %v712
    %875 = vmatpush1.bf16.msra.mxu0 %v711
    %876 = vmatprep.subr.bf16.mxu0 %v716
    %877 = vmatpush1.bf16.msra.mxu0 %v715
    %878 = vmatprep.subr.bf16.mxu0 %v720
    %879 = vmatpush1.bf16.msra.mxu0 %v719
    %880 = vmatprep.subr.bf16.mxu0 %v724
    %881 = vmatpush1.bf16.msra.mxu0 %v723
    %882 = vmatprep.subr.bf16.mxu0 %v728
    %883 = vmatpush1.bf16.msra.mxu0 %v727
    %884 = vmatprep.subr.bf16.mxu0 %v732
    %885 = vmatpush1.bf16.msra.mxu0 %v731
    %886 = vmatprep.subr.bf16.mxu0 %v736
    %887 = vmatpush1.bf16.msra.mxu0 %v735
    %888 = vmatprep.subr.bf16.mxu0 %v740
    %889 = vmatpush1.bf16.msra.mxu0 %v739
    %890 = vmatprep.subr.bf16.mxu0 %v744
    %891 = vmatpush1.bf16.msra.mxu0 %v743
    %892 = vmatprep.subr.bf16.mxu0 %v748
    %893 = vmatpush1.bf16.msra.mxu0 %v747
    %894 = vmatprep.subr.bf16.mxu0 %v752
    %895 = vmatpush1.bf16.msra.mxu0 %v751
    %896 = vmatprep.subr.bf16.mxu0 %v756
    %897 = vmatpush1.bf16.msra.mxu0 %v755
    %898 = vmatprep.subr.bf16.mxu0 %v760
    %899 = vmatpush1.bf16.msra.mxu0 %v759
    %900 = vmatprep.subr.bf16.mxu0 %v764
    %901 = vmatpush1.bf16.msra.mxu0 %v763
    %902 = vmatprep.mubr.bf16.mxu0 %v422
    %903 = vmatmul.mubr.bf16.gmra.mrb[0].mxu0 %v421
    %v904 = vpop.f32.mrb[0].mxu0
    %v905 = vadd.f32 %v500, %v904
    %v906 = vpop.f32.mrb[0].mxu0
    %v907 = vadd.f32 %v504, %v906
    %v908 = vpop.f32.mrb[0].mxu0
    %v909 = vpop.f32.mrb[0].mxu0
    %910 = vdwg.mxu0
    %v911 = vmax.f32 %v864, 0.0
    %v912 = vmax.f32 %v866, 0.0
    %v913 = vmax.f32 %v905, 0.0
    %v914 = vmax.f32 %v907, 0.0
    %v915 = vpack.c.bf16 %v911, %v911
    %v916 = vpack.c.bf16 %v912, %v912
    %v917 = vpack.c.bf16 %v913, %v913
    %v918 = vpack.c.bf16 %v914, %v914
    %v919 = vld [vmem:[#allocation7] sm:$0xf]
    %v920 = vld [vmem:[#allocation7 + $0x4] sm:$0xf]
    %v921 = vld [vmem:[#allocation7 + $0x8] sm:$0xf]
    %v922 = vld [vmem:[#allocation7 + $0xc] sm:$0xf]
    %v923 = vld [vmem:[#allocation7 + $0x10] sm:$0xf]
    %v924 = vld [vmem:[#allocation7 + $0x14] sm:$0xf]
    %v925 = vld [vmem:[#allocation7 + $0x18] sm:$0xf]
    %v926 = vld [vmem:[#allocation7 + $0x1c] sm:$0xf]
    %v927 = vld [vmem:[#allocation7 + $0x20] sm:$0xf]
    %v928 = vld [vmem:[#allocation7 + $0x24] sm:$0xf]
    %v929 = vld [vmem:[#allocation7 + $0x28] sm:$0xf]
    %v930 = vld [vmem:[#allocation7 + $0x2c] sm:$0xf]
    %v931 = vld [vmem:[#allocation7 + $0x30] sm:$0xf]
    %v932 = vld [vmem:[#allocation7 + $0x34] sm:$0xf]
    %v933 = vld [vmem:[#allocation7 + $0x38] sm:$0xf]
    %v934 = vld [vmem:[#allocation7 + $0x3c] sm:$0xf]
    %v935 = vld [vmem:[#allocation7 + $0x40] sm:$0xf]
    %v936 = vld [vmem:[#allocation7 + $0x44] sm:$0xf]
    %v937 = vld [vmem:[#allocation7 + $0x48] sm:$0xf]
    %v938 = vld [vmem:[#allocation7 + $0x4c] sm:$0xf]
    %v939 = vld [vmem:[#allocation7 + $0x50] sm:$0xf]
    %v940 = vld [vmem:[#allocation7 + $0x54] sm:$0xf]
    %v941 = vld [vmem:[#allocation7 + $0x58] sm:$0xf]
    %v942 = vld [vmem:[#allocation7 + $0x5c] sm:$0xf]
    %v943 = vld [vmem:[#allocation7 + $0x60] sm:$0xf]
    %v944 = vld [vmem:[#allocation7 + $0x64] sm:$0xf]
    %v945 = vld [vmem:[#allocation7 + $0x68] sm:$0xf]
    %v946 = vld [vmem:[#allocation7 + $0x6c] sm:$0xf]
    %v947 = vld [vmem:[#allocation7 + $0x70] sm:$0xf]
    %v948 = vld [vmem:[#allocation7 + $0x74] sm:$0xf]
    %v949 = vld [vmem:[#allocation7 + $0x78] sm:$0xf]
    %v950 = vld [vmem:[#allocation7 + $0x7c] sm:$0xf]
    %v951 = vld [vmem:[#allocation7 + $0x80] sm:$0xf]
    %v952 = vld [vmem:[#allocation7 + $0x84] sm:$0xf]
    %v953 = vld [vmem:[#allocation7 + $0x88] sm:$0xf]
    %v954 = vld [vmem:[#allocation7 + $0x8c] sm:$0xf]
    %v955 = vld [vmem:[#allocation7 + $0x90] sm:$0xf]
    %v956 = vld [vmem:[#allocation7 + $0x94] sm:$0xf]
    %v957 = vld [vmem:[#allocation7 + $0x98] sm:$0xf]
    %v958 = vld [vmem:[#allocation7 + $0x9c] sm:$0xf]
    %v959 = vld [vmem:[#allocation7 + $0xa0] sm:$0xf]
    %v960 = vld [vmem:[#allocation7 + $0xa4] sm:$0xf]
    %v961 = vld [vmem:[#allocation7 + $0xa8] sm:$0xf]
    %v962 = vld [vmem:[#allocation7 + $0xac] sm:$0xf]
    %v963 = vld [vmem:[#allocation7 + $0xb0] sm:$0xf]
    %v964 = vld [vmem:[#allocation7 + $0xb4] sm:$0xf]
    %v965 = vld [vmem:[#allocation7 + $0xb8] sm:$0xf]
    %v966 = vld [vmem:[#allocation7 + $0xbc] sm:$0xf]
    %v967 = vld [vmem:[#allocation7 + $0xc0] sm:$0xf]
    %v968 = vld [vmem:[#allocation7 + $0xc4] sm:$0xf]
    %v969 = vld [vmem:[#allocation7 + $0xc8] sm:$0xf]
    %v970 = vld [vmem:[#allocation7 + $0xcc] sm:$0xf]
    %v971 = vld [vmem:[#allocation7 + $0xd0] sm:$0xf]
    %v972 = vld [vmem:[#allocation7 + $0xd4] sm:$0xf]
    %v973 = vld [vmem:[#allocation7 + $0xd8] sm:$0xf]
    %v974 = vld [vmem:[#allocation7 + $0xdc] sm:$0xf]
    %v975 = vld [vmem:[#allocation7 + $0xe0] sm:$0xf]
    %v976 = vld [vmem:[#allocation7 + $0xe4] sm:$0xf]
    %v977 = vld [vmem:[#allocation7 + $0xe8] sm:$0xf]
    %v978 = vld [vmem:[#allocation7 + $0xec] sm:$0xf]
    %v979 = vld [vmem:[#allocation7 + $0xf0] sm:$0xf]
    %v980 = vld [vmem:[#allocation7 + $0xf4] sm:$0xf]
    %v981 = vld [vmem:[#allocation7 + $0xf8] sm:$0xf]
    %v982 = vld [vmem:[#allocation7 + $0xfc] sm:$0xf]
    %v983 = vld [vmem:[%s8] sm:$0x1]
    %v985 = vlaneseq
    %v986 = vshrl.u32 %v985, 7
    %v987 = vsub.s32 0, %v986
    %v988 = vrot.slane %v983, %v987
    %v1054 = vunpack.c.l.b16 %v919
    %v1055 = vunpack.c.l.b16 %v920
    %v1056 = vunpack.c.l.b16 %v921
    %v1057 = vunpack.c.l.b16 %v922
    %v1058 = vunpack.c.l.b16 %v923
    %v1059 = vunpack.c.l.b16 %v924
    %v1060 = vunpack.c.l.b16 %v925
    %v1061 = vunpack.c.l.b16 %v926
    %v1062 = vunpack.c.l.b16 %v927
    %v1063 = vunpack.c.l.b16 %v928
    %v1064 = vunpack.c.l.b16 %v929
    %v1065 = vunpack.c.l.b16 %v930
    %v1066 = vunpack.c.l.b16 %v931
    %v1067 = vunpack.c.l.b16 %v932
    %v1068 = vunpack.c.l.b16 %v933
    %v1069 = vunpack.c.l.b16 %v934
    %v1070 = vunpack.c.l.b16 %v935
    %v1071 = vunpack.c.l.b16 %v936
    %v1072 = vunpack.c.l.b16 %v937
    %v1073 = vunpack.c.l.b16 %v938
    %v1074 = vunpack.c.l.b16 %v939
    %v1075 = vunpack.c.l.b16 %v940
    %v1076 = vunpack.c.l.b16 %v941
    %v1077 = vunpack.c.l.b16 %v942
    %v1078 = vunpack.c.l.b16 %v943
    %v1079 = vunpack.c.l.b16 %v944
    %v1080 = vunpack.c.l.b16 %v945
    %v1081 = vunpack.c.l.b16 %v946
    %v1082 = vunpack.c.l.b16 %v947
    %v1083 = vunpack.c.l.b16 %v948
    %v1084 = vunpack.c.l.b16 %v949
    %v1085 = vunpack.c.l.b16 %v950
    %v1086 = vunpack.c.l.b16 %v951
    %v1087 = vunpack.c.l.b16 %v952
    %v1088 = vunpack.c.l.b16 %v953
    %v1089 = vunpack.c.l.b16 %v954
    %v1090 = vunpack.c.l.b16 %v955
    %v1091 = vunpack.c.l.b16 %v956
    %v1092 = vunpack.c.l.b16 %v957
    %v1093 = vunpack.c.l.b16 %v958
    %v1094 = vunpack.c.l.b16 %v959
    %v1095 = vunpack.c.l.b16 %v960
    %v1096 = vunpack.c.l.b16 %v961
    %v1097 = vunpack.c.l.b16 %v962
    %v1098 = vunpack.c.l.b16 %v963
    %v1099 = vunpack.c.l.b16 %v964
    %v1100 = vunpack.c.l.b16 %v965
    %v1101 = vunpack.c.l.b16 %v966
    %v1102 = vunpack.c.l.b16 %v967
    %v1103 = vunpack.c.l.b16 %v968
    %v1104 = vunpack.c.l.b16 %v969
    %v1105 = vunpack.c.l.b16 %v970
    %v1106 = vunpack.c.l.b16 %v971
    %v1107 = vunpack.c.l.b16 %v972
    %v1108 = vunpack.c.l.b16 %v973
    %v1109 = vunpack.c.l.b16 %v974
    %v1110 = vunpack.c.l.b16 %v975
    %v1111 = vunpack.c.l.b16 %v976
    %v1112 = vunpack.c.l.b16 %v977
    %v1113 = vunpack.c.l.b16 %v978
    %v1114 = vunpack.c.l.b16 %v979
    %v1115 = vunpack.c.l.b16 %v980
    %v1116 = vunpack.c.l.b16 %v981
    %v1117 = vunpack.c.l.b16 %v982
    %v1118 = vpack.c.b16 %v1055, %v1054
    %v1119 = vpack.c.b16 %v1057, %v1056
    %v1120 = vpack.c.b16 %v1059, %v1058
    %v1121 = vpack.c.b16 %v1061, %v1060
    %v1122 = vpack.c.b16 %v1063, %v1062
    %v1123 = vpack.c.b16 %v1065, %v1064
    %v1124 = vpack.c.b16 %v1067, %v1066
    %v1125 = vpack.c.b16 %v1069, %v1068
    %v1126 = vpack.c.b16 %v1071, %v1070
    %v1127 = vpack.c.b16 %v1073, %v1072
    %v1128 = vpack.c.b16 %v1075, %v1074
    %v1129 = vpack.c.b16 %v1077, %v1076
    %v1130 = vpack.c.b16 %v1079, %v1078
    %v1131 = vpack.c.b16 %v1081, %v1080
    %v1132 = vpack.c.b16 %v1083, %v1082
    %v1133 = vpack.c.b16 %v1085, %v1084
    %v1134 = vpack.c.b16 %v1087, %v1086
    %v1135 = vpack.c.b16 %v1089, %v1088
    %v1136 = vpack.c.b16 %v1091, %v1090
    %v1137 = vpack.c.b16 %v1093, %v1092
    %v1138 = vpack.c.b16 %v1095, %v1094
    %v1139 = vpack.c.b16 %v1097, %v1096
    %v1140 = vpack.c.b16 %v1099, %v1098
    %v1141 = vpack.c.b16 %v1101, %v1100
    %v1142 = vpack.c.b16 %v1103, %v1102
    %v1143 = vpack.c.b16 %v1105, %v1104
    %v1144 = vpack.c.b16 %v1107, %v1106
    %v1145 = vpack.c.b16 %v1109, %v1108
    %v1146 = vpack.c.b16 %v1111, %v1110
    %v1147 = vpack.c.b16 %v1113, %v1112
    %v1148 = vpack.c.b16 %v1115, %v1114
    %v1149 = vpack.c.b16 %v1117, %v1116
    %1182 = vmatprep.subr.bf16.mxu0 0
    %1183 = vmatpush1.bf16.msra.mxu0 %v1118
    %1184 = vmatprep.subr.bf16.mxu0 0
    %1185 = vmatpush1.bf16.msra.mxu0 %v1119
    %1186 = vmatprep.subr.bf16.mxu0 0
    %1187 = vmatpush1.bf16.msra.mxu0 %v1120
    %1188 = vmatprep.subr.bf16.mxu0 0
    %1189 = vmatpush1.bf16.msra.mxu0 %v1121
    %1190 = vmatprep.subr.bf16.mxu0 0
    %1191 = vmatpush1.bf16.msra.mxu0 %v1122
    %1192 = vmatprep.subr.bf16.mxu0 0
    %1193 = vmatpush1.bf16.msra.mxu0 %v1123
    %1194 = vmatprep.subr.bf16.mxu0 0
    %1195 = vmatpush1.bf16.msra.mxu0 %v1124
    %1196 = vmatprep.subr.bf16.mxu0 0
    %1197 = vmatpush1.bf16.msra.mxu0 %v1125
    %1198 = vmatprep.subr.bf16.mxu0 0
    %1199 = vmatpush1.bf16.msra.mxu0 %v1126
    %1200 = vmatprep.subr.bf16.mxu0 0
    %1201 = vmatpush1.bf16.msra.mxu0 %v1127
    %1202 = vmatprep.subr.bf16.mxu0 0
    %1203 = vmatpush1.bf16.msra.mxu0 %v1128
    %1204 = vmatprep.subr.bf16.mxu0 0
    %1205 = vmatpush1.bf16.msra.mxu0 %v1129
    %1206 = vmatprep.subr.bf16.mxu0 0
    %1207 = vmatpush1.bf16.msra.mxu0 %v1130
    %1208 = vmatprep.subr.bf16.mxu0 0
    %1209 = vmatpush1.bf16.msra.mxu0 %v1131
    %1210 = vmatprep.subr.bf16.mxu0 0
    %1211 = vmatpush1.bf16.msra.mxu0 %v1132
    %1212 = vmatprep.subr.bf16.mxu0 0
    %1213 = vmatpush1.bf16.msra.mxu0 %v1133
    %1214 = vmatprep.mubr.bf16.mxu0 %v916
    %1215 = vmatmul.mubr.bf16.gmra.mrb[0].mxu0 %v915
    %v1216 = vpop.f32.mrb[0].mxu0
    %v1217 = vadd.f32 %v988, %v1216
    %v1218 = vpop.f32.mrb[0].mxu0
    %v1219 = vpop.f32.mrb[0].mxu0
    %v1220 = vpop.f32.mrb[0].mxu0
    %1221 = vdwg.mxu0
    %1222 = vmatprep.subr.bf16.mxu0 0
    %1223 = vmatpush1.bf16.msra.mxu0 %v1134
    %1224 = vmatprep.subr.bf16.mxu0 0
    %1225 = vmatpush1.bf16.msra.mxu0 %v1135
    %1226 = vmatprep.subr.bf16.mxu0 0
    %1227 = vmatpush1.bf16.msra.mxu0 %v1136
    %1228 = vmatprep.subr.bf16.mxu0 0
    %1229 = vmatpush1.bf16.msra.mxu0 %v1137
    %1230 = vmatprep.subr.bf16.mxu0 0
    %1231 = vmatpush1.bf16.msra.mxu0 %v1138
    %1232 = vmatprep.subr.bf16.mxu0 0
    %1233 = vmatpush1.bf16.msra.mxu0 %v1139
    %1234 = vmatprep.subr.bf16.mxu0 0
    %1235 = vmatpush1.bf16.msra.mxu0 %v1140
    %1236 = vmatprep.subr.bf16.mxu0 0
    %1237 = vmatpush1.bf16.msra.mxu0 %v1141
    %1238 = vmatprep.subr.bf16.mxu0 0
    %1239 = vmatpush1.bf16.msra.mxu0 %v1142
    %1240 = vmatprep.subr.bf16.mxu0 0
    %1241 = vmatpush1.bf16.msra.mxu0 %v1143
    %1242 = vmatprep.subr.bf16.mxu0 0
    %1243 = vmatpush1.bf16.msra.mxu0 %v1144
    %1244 = vmatprep.subr.bf16.mxu0 0
    %1245 = vmatpush1.bf16.msra.mxu0 %v1145
    %1246 = vmatprep.subr.bf16.mxu0 0
    %1247 = vmatpush1.bf16.msra.mxu0 %v1146
    %1248 = vmatprep.subr.bf16.mxu0 0
    %1249 = vmatpush1.bf16.msra.mxu0 %v1147
    %1250 = vmatprep.subr.bf16.mxu0 0
    %1251 = vmatpush1.bf16.msra.mxu0 %v1148
    %1252 = vmatprep.subr.bf16.mxu0 0
    %1253 = vmatpush1.bf16.msra.mxu0 %v1149
    %1254 = vmatprep.mubr.bf16.mxu0 %v918
    %1255 = vmatmul.mubr.bf16.gmra.mrb[0].mxu0 %v917
    %v1256 = vpop.f32.mrb[0].mxu0
    %v1257 = vadd.f32 %v1217, %v1256
    %v1258 = vpop.f32.mrb[0].mxu0
    %v1259 = vpop.f32.mrb[0].mxu0
    %v1260 = vpop.f32.mrb[0].mxu0
    %1261 = vdwg.mxu0
    %1262 = vst [vmem:[%s9] sm:$0xff] %v1257
    // Predicated region
    $region54: #{actor_critic_forward.1} parent=1 // pred_check
      _
    $region55: #{actor_critic_forward.1} parent=1 // pred_check_branch
      %1264 = sbr.rel (0) target = $region57
    $region56: #{actor_critic_forward.1} parent=1 // pred_region
      _
    $region57: #{actor_critic_forward.1} parent=1 // pred_fallthru
      _
    // Predicated region
    $region58: #{actor_critic_forward.1} parent=1 // pred_check
      _
    $region59: #{actor_critic_forward.1} parent=1 // pred_check_branch
      %1266 = sbr.rel (0) target = $region61
    $region60: #{actor_critic_forward.1} parent=1 // pred_region
      _
    $region61: #{actor_critic_forward.1} parent=1 // pred_fallthru
      _
    %1267 = vsyncpa [#allocation3], 1
    %1268 = vsyncpa [#allocation5], 1
    %1269 = vsyncpa [#allocation8], 1

</llo_original>
